<compile_context>
chip_gen: v7x
topology: tpu7x:2x2x1
jax: 0.10.0
libtpu: 0.0.40
codegen_flags: <defaults>
</compile_context>

<pallas_src>
import functools
import math

import jax
import jax.numpy as jnp
from jax import lax
from jax.experimental import pallas as pl
from jax.experimental.pallas import tpu as pltpu


def _ntxent_lse_kernel(q_ref, k_ref, out_ref, s_sc, m_sc, l_sc, *, tm, tn, cw):
    i = pl.program_id(0)          # row-tile index   ("parallel")
    j = pl.program_id(1)          # col-tile index   ("arbitrary", reduction)
    n_col = pl.num_programs(1)

    @pl.when(j == 0)
    def _init():
        m_sc[...] = jnp.full(m_sc.shape, -jnp.inf, dtype=jnp.float32)
        l_sc[...] = jnp.zeros(l_sc.shape, dtype=jnp.float32)

    # Sim block on the MXU: q @ k^T (NT dot_general, no transposed copy), f32 acc.
    # Inputs are already normalized, temperature-folded and cast in the wrapper.
    s_sc[...] = lax.dot_general(
        q_ref[...], k_ref[...],
        dimension_numbers=(((1,), (1,)), ((), ())),
        preferred_element_type=jnp.float32)

    # Mask the global self-similarity diagonal only on tiles that intersect it.
    row0 = i * tm
    col0 = j * tn
    intersects = jnp.logical_and(row0 < col0 + tn, col0 < row0 + tm)

    @pl.when(intersects)
    def _mask_diag():
        r = row0 + lax.broadcasted_iota(jnp.int32, (tm, 1), 0)
        c = col0 + lax.broadcasted_iota(jnp.int32, (1, tn), 1)
        s_sc[...] = jnp.where(r == c, jnp.float32(-1e30), s_sc[...])

    # Lane-wide online logsumexp: fold the tile's 128-lane chunks with elementwise
    # max / exp / add (VPU + EUP only); no per-tile cross-lane reduction.
    n_chunks = tn // cw
    tile_max = s_sc[:, 0:cw]
    for ci in range(1, n_chunks):
        tile_max = jnp.maximum(tile_max, s_sc[:, ci * cw:(ci + 1) * cw])
    m_prev = m_sc[...]
    m_new = jnp.maximum(m_prev, tile_max)
    acc = jnp.exp(s_sc[:, 0:cw] - m_new)
    for ci in range(1, n_chunks):
        acc = acc + jnp.exp(s_sc[:, ci * cw:(ci + 1) * cw] - m_new)
    l_sc[...] = jnp.exp(m_prev - m_new) * l_sc[...] + acc
    m_sc[...] = m_new

    @pl.when(j == n_col - 1)
    def _finalize():
        # Single cross-lane (XLU) max + sum per row block.
        m_row = jnp.max(m_sc[...], axis=-1, keepdims=True)                 # (tm, 1)
        l_row = jnp.sum(l_sc[...] * jnp.exp(m_sc[...] - m_row),
                        axis=-1, keepdims=True)                            # (tm, 1)
        out_ref[...] = m_row + jnp.log(l_row)                              # per-row lse


def _pick_tile(dim, cap):
    # Largest tile <= cap that divides `dim` and is a multiple of 8 (and either
    # < 128 or a multiple of 128, for the lane-chunked accumulator update).
    for cand in (1024, 512, 256, 128, 64, 32, 16, 8):
        if cand <= cap and dim % cand == 0:
            return cand
    return None


def nt_xent_loss(z_i, z_j, tau, *, mxu_dtype=jnp.bfloat16,
                 tile_m=None, tile_n=None):
    """Pallas NT-Xent loss. z_i, z_j: [B, D]. Returns scalar f32 loss."""
    assert z_i.shape == z_j.shape and z_i.ndim == 2
    b, d = z_i.shape
    n = 2 * b
    if b % 8 != 0:
        # TODO(synk): support batch sizes not divisible by 8 (needs padded tiles
        # plus column-validity masking inside the online logsumexp).
        raise NotImplementedError("nt_xent_loss kernel requires batch_size % 8 == 0")

    # tm <= B guarantees n_row = 2B/tm >= 2, so the "parallel" row axis always has
    # work for both v7x TensorCores.  tn up to 1024 keeps per-step MXU work above
    # the ~0.35us per-step overhead while staying tiny in VMEM.
    tm = tile_m if tile_m is not None else _pick_tile(b, 512)
    tn = tile_n if tile_n is not None else _pick_tile(n, 1024)
    assert tm is not None and tn is not None
    assert b % tm == 0 and tm % 8 == 0, "row tile must divide B and be a multiple of 8"
    assert n % tn == 0 and tn % 8 == 0, "col tile must divide 2B and be a multiple of 8"
    assert tn % 128 == 0 or tn < 128, "col tile must be <128 or a multiple of 128"
    cw = 128 if tn % 128 == 0 else tn            # lane-chunk width of the accumulators

    # --- O(n*D) preprocessing done once in the wrapper (not per tile) -----------
    # Normalize rows (sqrt(max(sumsq,1e-16)) == max(||x||,1e-8), matching torch
    # CosineSimilarity), fold 1/sqrt(tau), then cast to the MXU dtype so the HBM
    # key stream is bf16 by default.
    p = jnp.concatenate([z_i, z_j], axis=0).astype(jnp.float32)
    inv = lax.rsqrt(jnp.maximum(jnp.sum(p * p, axis=-1, keepdims=True),
                                jnp.float32(1e-16)))
    pn = p * (inv * jnp.float32(1.0 / math.sqrt(float(tau))))
    pk = pn.astype(mxu_dtype)

    # Positive-pair logits from the SAME cast values the MXU sees (partner of row a
    # is row (a + B) mod 2B), f32 accumulation — keeps pos consistent with the
    # matching entry inside the logsumexp.
    pkf = pk.astype(jnp.float32)
    pos = jnp.sum(pkf * jnp.roll(pkf, -b, axis=0), axis=-1)             # (n,)

    grid_spec = pltpu.PrefetchScalarGridSpec(
        num_scalar_prefetch=0,
        grid=(n // tm, n // tn),
        in_specs=[
            pl.BlockSpec((tm, d), lambda i, j: (i, 0)),    # query rows (resident over j)
            pl.BlockSpec((tn, d), lambda i, j: (j, 0)),    # key rows (streamed)
        ],
        out_specs=pl.BlockSpec((tm, 1), lambda i, j: (i, 0)),
        scratch_shapes=[
            pltpu.VMEM((tm, tn), jnp.float32),   # sim block (lets pl.when gate the diag mask)
            pltpu.VMEM((tm, cw), jnp.float32),   # lane-wide running max
            pltpu.VMEM((tm, cw), jnp.float32),   # lane-wide running sum
        ],
    )

    isz = jnp.dtype(mxu_dtype).itemsize
    vmem_need = (2 * (tm + tn) * d * isz                       # double-buffered q/k tiles
                 + tm * tn * 4 + 2 * tm * max(cw, 128) * 4     # sim + accumulator scratch
                 + 2 * tm * 4)                                 # output block
    vmem_limit = int(min(max(2 * vmem_need + (4 << 20), 32 << 20), 64 << 20))

    cost = pl.CostEstimate(
        flops=2 * n * n * d,
        transcendentals=n * n,
        bytes_accessed=int(n * d * isz * (1 + n // tm) + n * 4),
    )

    lse = pl.pallas_call(
        functools.partial(_ntxent_lse_kernel, tm=tm, tn=tn, cw=cw),
        grid_spec=grid_spec,
        out_shape=jax.ShapeDtypeStruct((n, 1), jnp.float32),
        compiler_params=pltpu.CompilerParams(
            dimension_semantics=("parallel", "arbitrary"),
            vmem_limit_bytes=vmem_limit),
        cost_estimate=cost,
    )(pk, pk)

    return jnp.sum(lse[:, 0] - pos) / jnp.float32(n)


def _reference_nt_xent(z_i, z_j, tau):
    """Pure-JAX replica of the PyTorch forward (for verification)."""
    b = z_i.shape[0]
    n = 2 * b
    p = jnp.concatenate([z_i, z_j], axis=0).astype(jnp.float32)
    norm = jnp.maximum(jnp.linalg.norm(p, axis=-1, keepdims=True), 1e-8)
    pn = p / norm
    sim = (pn @ pn.T) / tau
    idx = jnp.arange(n)
    pos = sim[idx, (idx + b) % n].reshape(n, 1)
    neg_mask = jnp.ones((n, n), dtype=bool)
    neg_mask = neg_mask.at[idx, idx].set(False)
    neg_mask = neg_mask.at[idx, (idx + b) % n].set(False)
    negs = sim[neg_mask].reshape(n, n - 2)
    logits = jnp.concatenate([pos, negs], axis=1)
    lse = jax.scipy.special.logsumexp(logits, axis=-1)
    loss = jnp.sum(lse - logits[:, 0]) / n
    return loss


if __name__ == "__main__":
    tau = 0.5
    batch_size = 16
    hidden = 32

    key = jax.random.PRNGKey(0)
    k1, k2 = jax.random.split(key)
    z_i = jax.random.normal(k1, (batch_size, hidden), dtype=jnp.float32)
    z_j = jax.random.normal(k2, (batch_size, hidden), dtype=jnp.float32)

    ref = jax.block_until_ready(_reference_nt_xent(z_i, z_j, tau))

    # 1) Exact path: f32 MXU operands, auto tiles (grid 2x1 at this size).
    loss_f32 = jax.block_until_ready(
        nt_xent_loss(z_i, z_j, tau, mxu_dtype=jnp.float32))
    assert jnp.allclose(loss_f32, ref, rtol=1e-5, atol=1e-5), (loss_f32, ref)

    # 2) Exact path with forced small tiles (grid 4x4) to exercise the multi-step
    #    online logsumexp and the gated diagonal masking.
    loss_f32_t = jax.block_until_ready(
        nt_xent_loss(z_i, z_j, tau, mxu_dtype=jnp.float32, tile_m=8, tile_n=8))
    assert jnp.allclose(loss_f32_t, ref, rtol=1e-5, atol=1e-5), (loss_f32_t, ref)

    # 3) Default fast path: bf16 MXU operands with f32 accumulation (looser tol).
    loss_bf16 = jax.block_until_ready(nt_xent_loss(z_i, z_j, tau))
    assert jnp.allclose(loss_bf16, ref, rtol=2e-2, atol=2e-2), (loss_bf16, ref)

    print("KERNEL_OK")
</pallas_src>

<mosaic_0001>
module attributes {stable_mosaic.version = 11 : i64} {
  func.func @_ntxent_lse_kernel(%arg0: i32, %arg1: i32, %arg2: memref<16x32xf32, #tpu.memory_space<vmem>>, %arg3: memref<32x32xf32, #tpu.memory_space<vmem>>, %arg4: memref<16x1xf32, #tpu.memory_space<vmem>>, %arg5: memref<16x32xf32, #tpu.memory_space<vmem>>, %arg6: memref<16x32xf32, #tpu.memory_space<vmem>>, %arg7: memref<16x32xf32, #tpu.memory_space<vmem>>) attributes {dimension_semantics = [#tpu.dimension_semantics<parallel>, #tpu.dimension_semantics<arbitrary>], iteration_bounds = array<i64: 2, 1>, scalar_prefetch = 0 : i64, scratch_operands = 3 : i64, tpu.core_type = #tpu.core_type<tc>, window_params = [{transform_indices = @transform_0, window_bounds = array<i64: 16, 32>}, {transform_indices = @transform_1, window_bounds = array<i64: 32, 32>}, {transform_indices = @transform_2, window_bounds = array<i64: 16, 1>}]} {
    %c0_i32 = arith.constant 0 : i32
    %0 = arith.cmpi eq, %arg1, %c0_i32 : i32
    %1 = arith.extui %0 : i1 to i32
    %c0_i32_0 = arith.constant 0 : i32
    %2 = arith.cmpi ne, %1, %c0_i32_0 : i32
    scf.if %2 {
      %cst_23 = arith.constant 0xFF800000 : f32
      %32 = vector.broadcast %cst_23 : f32 to vector<16x32xf32>
      %c0_24 = arith.constant 0 : index
      %c0_25 = arith.constant 0 : index
      %33 = vector.load %arg6[%c0_24, %c0_25] : memref<16x32xf32, #tpu.memory_space<vmem>>, vector<16x32xf32>
      tpu.vector_store %arg6[%c0_24, %c0_25], %32 {strides = array<i32>} : memref<16x32xf32, #tpu.memory_space<vmem>>, vector<16x32xf32>,
      %cst_26 = arith.constant 0.000000e+00 : f32
      %34 = vector.broadcast %cst_26 : f32 to vector<16x32xf32>
      %c0_27 = arith.constant 0 : index
      %c0_28 = arith.constant 0 : index
      %35 = vector.load %arg7[%c0_27, %c0_28] : memref<16x32xf32, #tpu.memory_space<vmem>>, vector<16x32xf32>
      tpu.vector_store %arg7[%c0_27, %c0_28], %34 {strides = array<i32>} : memref<16x32xf32, #tpu.memory_space<vmem>>, vector<16x32xf32>,
    } else {
    }
    %c0 = arith.constant 0 : index
    %c0_1 = arith.constant 0 : index
    %3 = vector.load %arg2[%c0, %c0_1] : memref<16x32xf32, #tpu.memory_space<vmem>>, vector<16x32xf32>
    %c0_2 = arith.constant 0 : index
    %c0_3 = arith.constant 0 : index
    %4 = vector.load %arg3[%c0_2, %c0_3] : memref<32x32xf32, #tpu.memory_space<vmem>>, vector<32x32xf32>
    %cst = arith.constant dense<0.000000e+00> : vector<16x32xf32>
    %5 = tpu.matmul %3, %4, %cst {dimension_numbers = #tpu.dot_dimension_numbers<[1], [1], [0], [0], [0, 0, 1, 0], [], []>} : vector<16x32xf32>, vector<32x32xf32>, vector<16x32xf32> -> vector<16x32xf32>
    %c0_4 = arith.constant 0 : index
    %c0_5 = arith.constant 0 : index
    %6 = vector.load %arg5[%c0_4, %c0_5] : memref<16x32xf32, #tpu.memory_space<vmem>>, vector<16x32xf32>
    tpu.vector_store %arg5[%c0_4, %c0_5], %5 {strides = array<i32>} : memref<16x32xf32, #tpu.memory_space<vmem>>, vector<16x32xf32>,
    %c16_i32 = arith.constant 16 : i32
    %7 = arith.muli %arg0, %c16_i32 : i32
    %c32_i32 = arith.constant 32 : i32
    %8 = arith.muli %arg1, %c32_i32 : i32
    %c32_i32_6 = arith.constant 32 : i32
    %9 = arith.addi %8, %c32_i32_6 : i32
    %10 = arith.cmpi slt, %7, %9 : i32
    %c16_i32_7 = arith.constant 16 : i32
    %11 = arith.addi %7, %c16_i32_7 : i32
    %12 = arith.cmpi slt, %8, %11 : i32
    %13 = arith.andi %10, %12 : i1
    %14 = arith.extui %13 : i1 to i32
    %c0_i32_8 = arith.constant 0 : i32
    %15 = arith.cmpi ne, %14, %c0_i32_8 : i32
    scf.if %15 {
      %32 = tpu.iota {dimensions = array<i32: 0>} : vector<16x1xi32>
      %33 = vector.broadcast %7 : i32 to vector<16x1xi32>
      %34 = arith.addi %33, %32 : vector<16x1xi32>
      %35 = tpu.iota {dimensions = array<i32: 1>} : vector<1x32xi32>
      %36 = vector.broadcast %8 : i32 to vector<1x32xi32>
      %37 = arith.addi %36, %35 : vector<1x32xi32>
      %38 = vector.broadcast %34 : vector<16x1xi32> to vector<16x32xi32>
      %39 = vector.broadcast %37 : vector<1x32xi32> to vector<16x32xi32>
      %40 = arith.cmpi eq, %38, %39 : vector<16x32xi32>
      %c0_23 = arith.constant 0 : index
      %c0_24 = arith.constant 0 : index
      %41 = vector.load %arg5[%c0_23, %c0_24] : memref<16x32xf32, #tpu.memory_space<vmem>>, vector<16x32xf32>
      %cst_25 = arith.constant -1.000000e+30 : f32
      %42 = vector.broadcast %cst_25 : f32 to vector<16x32xf32>
      %43 = arith.select %40, %42, %41 : vector<16x32xi1>, vector<16x32xf32>
      %c0_26 = arith.constant 0 : index
      %c0_27 = arith.constant 0 : index
      %44 = vector.load %arg5[%c0_26, %c0_27] : memref<16x32xf32, #tpu.memory_space<vmem>>, vector<16x32xf32>
      tpu.vector_store %arg5[%c0_26, %c0_27], %43 {strides = array<i32>} : memref<16x32xf32, #tpu.memory_space<vmem>>, vector<16x32xf32>,
    } else {
    }
    %c0_9 = arith.constant 0 : index
    %c0_10 = arith.constant 0 : index
    %16 = vector.load %arg5[%c0_9, %c0_10] : memref<16x32xf32, #tpu.memory_space<vmem>>, vector<16x32xf32>
    %c0_11 = arith.constant 0 : index
    %c0_12 = arith.constant 0 : index
    %17 = vector.load %arg6[%c0_11, %c0_12] : memref<16x32xf32, #tpu.memory_space<vmem>>, vector<16x32xf32>
    %18 = arith.maximumf %17, %16 : vector<16x32xf32>
    %c0_13 = arith.constant 0 : index
    %c0_14 = arith.constant 0 : index
    %19 = vector.load %arg5[%c0_13, %c0_14] : memref<16x32xf32, #tpu.memory_space<vmem>>, vector<16x32xf32>
    %20 = arith.subf %19, %18 : vector<16x32xf32>
    %21 = math.exp %20 : vector<16x32xf32>
    %22 = arith.subf %17, %18 : vector<16x32xf32>
    %23 = math.exp %22 : vector<16x32xf32>
    %c0_15 = arith.constant 0 : index
    %c0_16 = arith.constant 0 : index
    %24 = vector.load %arg7[%c0_15, %c0_16] : memref<16x32xf32, #tpu.memory_space<vmem>>, vector<16x32xf32>
    %25 = arith.mulf %23, %24 : vector<16x32xf32>
    %26 = arith.addf %25, %21 : vector<16x32xf32>
    %c0_17 = arith.constant 0 : index
    %c0_18 = arith.constant 0 : index
    %27 = vector.load %arg7[%c0_17, %c0_18] : memref<16x32xf32, #tpu.memory_space<vmem>>, vector<16x32xf32>
    tpu.vector_store %arg7[%c0_17, %c0_18], %26 {strides = array<i32>} : memref<16x32xf32, #tpu.memory_space<vmem>>, vector<16x32xf32>,
    %c0_19 = arith.constant 0 : index
    %c0_20 = arith.constant 0 : index
    %28 = vector.load %arg6[%c0_19, %c0_20] : memref<16x32xf32, #tpu.memory_space<vmem>>, vector<16x32xf32>
    tpu.vector_store %arg6[%c0_19, %c0_20], %18 {strides = array<i32>} : memref<16x32xf32, #tpu.memory_space<vmem>>, vector<16x32xf32>,
    %c0_i32_21 = arith.constant 0 : i32
    %29 = arith.cmpi eq, %arg1, %c0_i32_21 : i32
    %30 = arith.extui %29 : i1 to i32
    %c0_i32_22 = arith.constant 0 : i32
    %31 = arith.cmpi ne, %30, %c0_i32_22 : i32
    scf.if %31 {
      %c0_23 = arith.constant 0 : index
      %c0_24 = arith.constant 0 : index
      %32 = vector.load %arg6[%c0_23, %c0_24] : memref<16x32xf32, #tpu.memory_space<vmem>>, vector<16x32xf32>
      %cst_25 = arith.constant dense<0xFF800000> : vector<16xf32>
      %33 = vector.multi_reduction <maximumf>, %32, %cst_25 [1] : vector<16x32xf32> to vector<16xf32>
      %34 = vector.shape_cast %33 : vector<16xf32> to vector<16x1xf32>
      %c0_26 = arith.constant 0 : index
      %c0_27 = arith.constant 0 : index
      %35 = vector.load %arg7[%c0_26, %c0_27] : memref<16x32xf32, #tpu.memory_space<vmem>>, vector<16x32xf32>
      %c0_28 = arith.constant 0 : index
      %c0_29 = arith.constant 0 : index
      %36 = vector.load %arg6[%c0_28, %c0_29] : memref<16x32xf32, #tpu.memory_space<vmem>>, vector<16x32xf32>
      %37 = vector.broadcast %34 : vector<16x1xf32> to vector<16x32xf32>
      %38 = arith.subf %36, %37 : vector<16x32xf32>
      %39 = math.exp %38 : vector<16x32xf32>
      %40 = arith.mulf %35, %39 : vector<16x32xf32>
      %cst_30 = arith.constant dense<0.000000e+00> : vector<16xf32>
      %41 = vector.multi_reduction <add>, %40, %cst_30 [1] : vector<16x32xf32> to vector<16xf32>
      %42 = vector.shape_cast %41 : vector<16xf32> to vector<16x1xf32>
      %43 = math.log %42 : vector<16x1xf32>
      %44 = arith.addf %34, %43 : vector<16x1xf32>
      %c0_31 = arith.constant 0 : index
      %c0_32 = arith.constant 0 : index
      %45 = vector.load %arg4[%c0_31, %c0_32] : memref<16x1xf32, #tpu.memory_space<vmem>>, vector<16x1xf32>
      tpu.vector_store %arg4[%c0_31, %c0_32], %44 {strides = array<i32>} : memref<16x1xf32, #tpu.memory_space<vmem>>, vector<16x1xf32>,
    } else {
    }
    return
  }
  func.func @transform_0(%arg0: i32, %arg1: i32) -> (i32, i32) {
    %c0_i32 = arith.constant 0 : i32
    %c0_i32_0 = arith.constant 0 : i32
    return %arg0, %c0_i32 : i32, i32
  }
  func.func @transform_1(%arg0: i32, %arg1: i32) -> (i32, i32) {
    %c0_i32 = arith.constant 0 : i32
    %c0_i32_0 = arith.constant 0 : i32
    return %arg1, %c0_i32 : i32, i32
  }
  func.func @transform_2(%arg0: i32, %arg1: i32) -> (i32, i32) {
    %c0_i32 = arith.constant 0 : i32
    %c0_i32_0 = arith.constant 0 : i32
    return %arg0, %c0_i32 : i32, i32
  }
}

</mosaic_0001>

<llo_original>
// kernel: tpu_custom_call.1
$region0: #{tpu_custom_call.1}
  #allocation0 [shape = 'u32[]', space=smem, size = 0x4, offset = 0x4, fixed_abs, tag = 'smem constant byte address 0x4 - core index']
  #allocation1 [shape = 'u32[144,128]{1,0:T(1,128)}', space=vmem, size = 0x12000, scoped, tag = 'internal scratch']
  #allocation2 [shape = 'f32[16,32]{1,0:T(8,128)}', space=vmem, size = 0x2000, scoped, tag = 'scratch operand']
  #allocation3 [shape = 'f32[16,32]{1,0:T(8,128)}', space=vmem, size = 0x2000, scoped, tag = 'scratch operand']
  #allocation4 [shape = 'f32[16,32]{1,0:T(8,128)}', space=vmem, size = 0x2000, scoped, tag = 'scratch operand']
  %s0 = inlined_call_operand.hbm [shape: f32[32,32], index: 0, kind: input, shape index: {}]
  %s1 = inlined_call_operand.hbm [shape: f32[32,32], index: 1, kind: input, shape index: {}]
  %s2 = inlined_call_operand.vmem [shape: f32[32,1], index: 2, kind: output, shape index: {}]
  %s3 = sld [smem:[#allocation0]]
  $region61: #{tpu_custom_call.1} parent=0
    _
  %s5 = ssub.s32 1, %s3
  %s6 = scalar_select 0, %s5, %s3
  $region1: #{tpu_custom_call.1} parent=0
    #allocation5 [shape = 'u8[16384]{0}', space=vmem, size = 0x4000, scoped, tag = 'input window, operand 0']
    #allocation6 [shape = 's32[2]{0}', space=sflag, size = 0x8, scoped, tag = 'scoped memory for tpu_custom_call.1']
    #allocation7 [shape = 'u8[16384]{0}', space=vmem, size = 0x4000, scoped, tag = 'input window, operand 1, single buffered']
    #allocation8 [shape = 's32[1]{0}', space=sflag, size = 0x4, scoped, tag = 'scoped memory for tpu_custom_call.1']
    %7 = vsyncpa [#allocation6], 0
    %s8 = scalar_lea.sflag [#allocation6], 1
    %9 = vsyncpa %s8, 0
    %10 = vsyncpa [#allocation8], 0
    loop: start=0, step=1, limit=4
    $region2: #{tpu_custom_call.1} parent=1 // loop_pre_header
      _
    $region3: #{tpu_custom_call.1} parent=1 // loop_header
      %s12 = sphi 0, %s16
      %p13 = scmp.ge.s32.totalorder %s12, 4
      %s19 = sphi 0, %s31
      %s20 = sphi 0, %s27
      %s21 = sphi 0, %s19
      %s22 = sphi 0, %s20
      %s23 = sphi 0, %s21
      %s24 = sphi 0, %s22
      %s34 = sphi 0, %s36
      %s37 = sphi 0, %s34
      %s38 = sphi 0, %s37
      %s54 = sphi 0, %s38
      %s60 = sphi 0, %s62
      %s63 = sphi 0, %s60
      %s64 = sphi 0, %s63
      %s80 = sphi 0, %s64
      %s86 = sphi 0, %s88
      %s89 = sphi 0, %s86
      %s90 = sphi 0, %s89
      %s106 = sphi 0, %s90
    $region4: #{tpu_custom_call.1} parent=1 // loop_header_branch
      %15 = sbr.rel (%p13) target = $region8
    $region5: #{tpu_custom_call.1} parent=1 // loop_body
      %s17 = ssub.s32 %s12, 1
      %s18 = ssub.s32 %s12, 2
      %s25 = sadd.s32 1, %s20
      %p26 = scmp.ge.s32.totalorder %s25, 1
      %s27 = scalar_select %p26, 0, %s25
      %s28 = sadd.s32 1, %s19
      %s29 = scalar_select %p26, %s28, %s19
      %p30 = scmp.ge.s32.totalorder %s29, 2
      %s31 = scalar_select %p30, 0, %s29
      %s32 = ssub.s32 %s19, %s31
      %p33 = scmp.eq.s32.totalorder %s32, 0
      %s35 = sadd.s32 %s34, 1
      %s36 = scalar_select %p33, %s34, %s35
      %p39 = pneg %p33
      %p40 = scmp.eq.s32.totalorder %s12, 1
      %p41 = por %p39, %p40
      %p42 = scmp.ne.s32.totalorder %s34, %s37
      %p43 = scmp.eq.s32.totalorder %s12, 0
      %p44 = por %p42, %p43
      %p45 = scmp.ne.s32.totalorder %s34, %s37
      %p46 = scmp.eq.s32.totalorder %s17, 1
      %p47 = por %p45, %p46
      %p48 = scmp.ne.s32.totalorder %s37, %s38
      %p49 = scmp.eq.s32.totalorder %s17, 0
      %p50 = por %p48, %p49
      %p51 = scmp.ne.s32.totalorder %s37, %s38
      %p52 = scmp.eq.s32.totalorder %s18, 1
      %p53 = por %p51, %p52
      %p55 = scmp.ne.s32.totalorder %s38, %s54
      %p56 = scmp.eq.s32.totalorder %s18, 0
      %p57 = por %p55, %p56
      %s58 = ssub.s32 %s20, %s27
      %p59 = scmp.eq.s32.totalorder %s58, 0
      %s61 = sadd.s32 %s60, 1
      %s62 = scalar_select %p59, %s60, %s61
      %p65 = pneg %p59
      %p66 = scmp.eq.s32.totalorder %s12, 1
      %p67 = por %p65, %p66
      %p68 = scmp.ne.s32.totalorder %s60, %s63
      %p69 = scmp.eq.s32.totalorder %s12, 0
      %p70 = por %p68, %p69
      %p71 = scmp.ne.s32.totalorder %s60, %s63
      %p72 = scmp.eq.s32.totalorder %s17, 1
      %p73 = por %p71, %p72
      %p74 = scmp.ne.s32.totalorder %s63, %s64
      %p75 = scmp.eq.s32.totalorder %s17, 0
      %p76 = por %p74, %p75
      %p77 = scmp.ne.s32.totalorder %s63, %s64
      %p78 = scmp.eq.s32.totalorder %s18, 1
      %p79 = por %p77, %p78
      %p81 = scmp.ne.s32.totalorder %s64, %s80
      %p82 = scmp.eq.s32.totalorder %s18, 0
      %p83 = por %p81, %p82
      %s84 = ssub.s32 %s19, %s31
      %p85 = scmp.eq.s32.totalorder %s84, 0
      %s87 = sadd.s32 %s86, 1
      %s88 = scalar_select %p85, %s86, %s87
      %p91 = pneg %p85
      %p92 = scmp.eq.s32.totalorder %s12, 1
      %p93 = por %p91, %p92
      %p94 = scmp.ne.s32.totalorder %s86, %s89
      %p95 = scmp.eq.s32.totalorder %s12, 0
      %p96 = por %p94, %p95
      %p97 = scmp.ne.s32.totalorder %s86, %s89
      %p98 = scmp.eq.s32.totalorder %s17, 1
      %p99 = por %p97, %p98
      %p100 = scmp.ne.s32.totalorder %s89, %s90
      %p101 = scmp.eq.s32.totalorder %s17, 0
      %p102 = por %p100, %p101
      %p103 = scmp.ne.s32.totalorder %s89, %s90
      %p104 = scmp.eq.s32.totalorder %s18, 1
      %p105 = por %p103, %p104
      %p107 = scmp.ne.s32.totalorder %s90, %s106
      %p108 = scmp.eq.s32.totalorder %s18, 0
      %p109 = por %p107, %p108
      %p110 = scmp.le.s32.totalorder 1, %s12
      %p111 = scmp.lt.s32.totalorder %s12, 3
      %p112 = pnand %p110, %p111
      %p113 = pneg %p112
      // Predicated region
      $region9: #{tpu_custom_call.1} parent=5 // pred_check
        _
      $region10: #{tpu_custom_call.1} parent=5 // pred_check_branch
        %115 = sbr.rel (%p112) target = $region12
      $region11: #{tpu_custom_call.1} parent=5 // pred_region
        %s116 = ssub.s32 %s12, 1
        // Predicated region
        $region13: #{tpu_custom_call.1} parent=11 // pred_check
          %p117 = pneg %p76
        $region14: #{tpu_custom_call.1} parent=11 // pred_check_branch
          %119 = sbr.rel (%p117) target = $region16
        $region15: #{tpu_custom_call.1} parent=11 // pred_region
          %s120 = smul.u32 4, %s22
          %s122 = ssub.s32 512, 512
          %123 = vsyncadd [#allocation8], %s122
          %s124 = smul.addr %s120, 128
          %s125 = scalar_lea.hbm %s1, %s124
          %s126 = sshll.u32 [#allocation7], 4
          %s127 = int_to_ptr.vmem [resolvable:$true] %s126
          %132 = dma.hbm_to_vmem [thread:$0]  %s125, 512, %s127, [#allocation8], 128, 128, 8
        $region16: #{tpu_custom_call.1} parent=11 // pred_fallthru
          _
      $region12: #{tpu_custom_call.1} parent=5 // pred_fallthru
        _
      %p133 = scmp.lt.s32.totalorder %s12, 2
      // Predicated region
      $region17: #{tpu_custom_call.1} parent=5 // pred_check
        %p134 = pneg %p133
      $region18: #{tpu_custom_call.1} parent=5 // pred_check_branch
        %136 = sbr.rel (%p134) target = $region20
      $region19: #{tpu_custom_call.1} parent=5 // pred_region
        // Predicated region
        $region21: #{tpu_custom_call.1} parent=19 // pred_check
          %p137 = pneg %p44
        $region22: #{tpu_custom_call.1} parent=19 // pred_check_branch
          %139 = sbr.rel (%p137) target = $region24
        $region23: #{tpu_custom_call.1} parent=19 // pred_region
          %s140 = sand.u32 %s34, 1
          %s141 = scalar_lea.sflag [#allocation6], %s140
          %s142 = sand.u32 %s34, 1
          %s143 = smul.addr %s142, 16
          %s144 = scalar_lea.vmem [#allocation5], %s143
          %s145 = smul.u32 2, %s19
          %s147 = ssub.s32 256, 256
          %148 = vsyncadd %s141, %s147
          %s149 = smul.addr %s145, 128
          %s150 = scalar_lea.hbm %s0, %s149
          %s151 = sshll.u32 %s144, 4
          %s152 = int_to_ptr.vmem [resolvable:$true] %s151
          %157 = dma.hbm_to_vmem [thread:$0]  %s150, 256, %s152, %s141, 128, 128, 8
        $region24: #{tpu_custom_call.1} parent=19 // pred_fallthru
          _
      $region20: #{tpu_custom_call.1} parent=5 // pred_fallthru
        _
      %p158 = scmp.le.s32.totalorder 1, %s12
      %p159 = scmp.lt.s32.totalorder %s12, 3
      %p160 = pnand %p158, %p159
      %p161 = pneg %p160
      // Predicated region
      $region25: #{tpu_custom_call.1} parent=5 // pred_check
        _
      $region26: #{tpu_custom_call.1} parent=5 // pred_check_branch
        %163 = sbr.rel (%p160) target = $region28
      $region27: #{tpu_custom_call.1} parent=5 // pred_region
        %s164 = ssub.s32 %s12, 1
        %s165 = sand.u32 %s37, 1
        %s166 = scalar_lea.sflag [#allocation6], %s165
        %s167 = sand.u32 %s37, 1
        %s168 = smul.addr %s167, 16
        %s169 = scalar_lea.vmem [#allocation5], %s168
        // Predicated region
        $region29: #{tpu_custom_call.1} parent=27 // pred_check
          %p170 = pneg %p50
        $region30: #{tpu_custom_call.1} parent=27 // pred_check_branch
          %172 = sbr.rel (%p170) target = $region32
        $region31: #{tpu_custom_call.1} parent=27 // pred_region
          %173 = dma.done %s166, 256
        $region32: #{tpu_custom_call.1} parent=27 // pred_fallthru
          _
        // Predicated region
        $region33: #{tpu_custom_call.1} parent=27 // pred_check
          %p174 = pneg %p76
        $region34: #{tpu_custom_call.1} parent=27 // pred_check_branch
          %176 = sbr.rel (%p174) target = $region36
        $region35: #{tpu_custom_call.1} parent=27 // pred_region
          %177 = dma.done [#allocation8], 512
        $region36: #{tpu_custom_call.1} parent=27 // pred_fallthru
          _
        %s178 = sand.u32 %s37, 1
        %s179 = scalar_lea.sflag [#allocation6], %s178
        %s180 = sand.u32 %s37, 1
        %s181 = smul.addr %s180, 16
        %s182 = scalar_lea.vmem [#allocation5], %s181
        %p183 = pneg %p50
        %p184 = pneg %p47
        %p185 = pneg %p76
        %p186 = pneg %p73
        %p187 = pneg %p102
        %p188 = pneg %p99
        %s189 = smul.u32 2, %s21
        %p190 = scmp.lt.s32.totalorder %s189, 3
        %s191 = scalar_select %p190, %s189, 3
        %s192 = smul.addr %s191, 8
        %s193 = scalar_lea.vmem %s2, %s192
        %s194 = smul.u32 2, %s21
        %s195 = smul.u32 4, %s22
        %s196 = smul.u32 2, %s21
        %p197 = scmp.lt.s32.totalorder %s196, 3
        %s198 = scalar_select %p197, %s196, 3
        %s199 = smul.addr %s198, 8
        %s200 = scalar_lea.vmem %s2, %s199
        %s201 = smul.u32 2, %s21
        %p202 = scmp.eq.s32.totalorder %s22, 0
        // Predicated region
        $region37: #{tpu_custom_call.1} parent=27 // pred_check
          %p203 = pneg %p202
        $region38: #{tpu_custom_call.1} parent=27 // pred_check_branch
          %205 = sbr.rel (%p203) target = $region40
        $region39: #{tpu_custom_call.1} parent=27 // pred_region
          %vm206 = vcmask 261120
          %207 = vst.msk [vmem:[#allocation3] sm:$0xff] %vm206, -inf
          %208 = vst.msk [vmem:[#allocation3 + $0x8] sm:$0xff] %vm206, -inf
          %209 = vst.msk [vmem:[#allocation4] sm:$0xff] %vm206, 0.0
          %210 = vst.msk [vmem:[#allocation4 + $0x8] sm:$0xff] %vm206, 0.0
        $region40: #{tpu_custom_call.1} parent=27 // pred_fallthru
          _
        %v211 = vld [vmem:[%s169] sm:$0xff]
        %v212 = vld [vmem:[%s169 + $0x8] sm:$0xff]
        %v213 = vld [vmem:[#allocation7] sm:$0xff]
        %v214 = vld [vmem:[#allocation7 + $0x8] sm:$0xff]
        %v215 = vld [vmem:[#allocation7 + $0x10] sm:$0xff]
        %v216 = vld [vmem:[#allocation7 + $0x18] sm:$0xff]
        %vm217 = vcmask 261120
        %v219 = vsel %vm217, %v211, 0
        %v222 = vsel %vm217, %v212, 0
        %v225 = vsel %vm217, %v213, 0
        %v228 = vsel %vm217, %v214, 0
        %v231 = vsel %vm217, %v215, 0
        %v234 = vsel %vm217, %v216, 0
        %236 = vmatprep.subr.mxu0 0.0
        %237 = vmatpush1.xpose.msra.mxu0 %v225
        %238 = vmatprep.subr.mxu0 0.0
        %239 = vmatpush1.xpose.msra.mxu0 %v228
        %240 = vmatprep.subr.mxu0 0.0
        %241 = vmatpush1.xpose.msra.mxu0 %v231
        %242 = vmatprep.subr.mxu0 0.0
        %243 = vmatpush1.xpose.msra.mxu0 %v234
        %244 = vmatprep.subr.mxu0 0.0
        %245 = vmatpush1.xpose.msra.mxu0 0.0
        %246 = vmatprep.subr.mxu0 0.0
        %247 = vmatpush1.xpose.msra.mxu0 0.0
        %248 = vmatprep.subr.mxu0 0.0
        %249 = vmatpush1.xpose.msra.mxu0 0.0
        %250 = vmatprep.subr.mxu0 0.0
        %251 = vmatpush1.xpose.msra.mxu0 0.0
        %252 = vmatprep.subr.mxu0 0.0
        %253 = vmatpush1.xpose.msra.mxu0 0.0
        %254 = vmatprep.subr.mxu0 0.0
        %255 = vmatpush1.xpose.msra.mxu0 0.0
        %256 = vmatprep.subr.mxu0 0.0
        %257 = vmatpush1.xpose.msra.mxu0 0.0
        %258 = vmatprep.subr.mxu0 0.0
        %259 = vmatpush1.xpose.msra.mxu0 0.0
        %260 = vmatprep.subr.mxu0 0.0
        %261 = vmatpush1.xpose.msra.mxu0 0.0
        %262 = vmatprep.subr.mxu0 0.0
        %263 = vmatpush1.xpose.msra.mxu0 0.0
        %264 = vmatprep.subr.mxu0 0.0
        %265 = vmatpush1.xpose.msra.mxu0 0.0
        %266 = vmatprep.subr.mxu0 0.0
        %267 = vmatpush1.xpose.msra.mxu0 0.0
        %268 = vmatprep.subr.mxu0 0.0
        %269 = vmatpush1.xpose.msra.mxu0 0.0
        %270 = vmatprep.subr.mxu0 0.0
        %271 = vmatpush1.xpose.msra.mxu0 0.0
        %272 = vmatprep.subr.mxu0 0.0
        %273 = vmatpush1.xpose.msra.mxu0 0.0
        %274 = vmatprep.subr.mxu0 0.0
        %275 = vmatpush1.xpose.msra.mxu0 0.0
        %276 = vmatprep.subr.mxu0 0.0
        %277 = vmatpush1.xpose.msra.mxu0 0.0
        %278 = vmatprep.subr.mxu0 0.0
        %279 = vmatpush1.xpose.msra.mxu0 0.0
        %280 = vmatprep.subr.mxu0 0.0
        %281 = vmatpush1.xpose.msra.mxu0 0.0
        %282 = vmatprep.subr.mxu0 0.0
        %283 = vmatpush1.xpose.msra.mxu0 0.0
        %284 = vmatprep.subr.mxu0 0.0
        %285 = vmatpush1.xpose.msra.mxu0 0.0
        %286 = vmatprep.subr.mxu0 0.0
        %287 = vmatpush1.xpose.msra.mxu0 0.0
        %288 = vmatprep.subr.mxu0 0.0
        %289 = vmatpush1.xpose.msra.mxu0 0.0
        %290 = vmatprep.subr.mxu0 0.0
        %291 = vmatpush1.xpose.msra.mxu0 0.0
        %292 = vmatprep.subr.mxu0 0.0
        %293 = vmatpush1.xpose.msra.mxu0 0.0
        %294 = vmatprep.subr.mxu0 0.0
        %295 = vmatpush1.xpose.msra.mxu0 0.0
        %296 = vmatprep.subr.mxu0 0.0
        %297 = vmatpush1.xpose.msra.mxu0 0.0
        %298 = vmatprep.subr.mxu0 0.0
        %299 = vmatpush1.xpose.msra.mxu0 0.0
        %300 = vmatprep.mubr.f32.mxu0 0.0
        %301 = vmatmul.mubr.f32.gmra.mrb[0].mxu0 %v219
        %v302 = vpop.f32.mrb[0].mxu0
        %v303 = vadd.f32 0.0, %v302
        %v304 = vpop.f32.mrb[0].mxu0
        %305 = vmatprep.mubr.f32.mxu0 0.0
        %306 = vmatmul.mubr.f32.gmra.mrb[0].mxu0 %v222
        %v307 = vpop.f32.mrb[0].mxu0
        %v308 = vadd.f32 0.0, %v307
        %v309 = vpop.f32.mrb[0].mxu0
        %310 = vdwg.mxu0
        %311 = vst.msk [vmem:[#allocation2] sm:$0xff] %vm217, %v303
        %312 = vst.msk [vmem:[#allocation2 + $0x8] sm:$0xff] %vm217, %v308
        %s313 = smul.u32 %s21, 16
        %s314 = smul.u32 %s22, 32
        %s315 = sadd.s32 %s314, 32
        %p316 = scmp.lt.s32.totalorder %s313, %s315
        %s317 = sadd.s32 %s313, 16
        %p318 = scmp.lt.s32.totalorder %s314, %s317
        %p319 = pnand %p316, %p318
        %p320 = pneg %p319
        // Predicated region
        $region41: #{tpu_custom_call.1} parent=27 // pred_check
          _
        $region42: #{tpu_custom_call.1} parent=27 // pred_check_branch
          %322 = sbr.rel (%p319) target = $region44
        $region43: #{tpu_custom_call.1} parent=27 // pred_region
          %v323 = vlaneseq
          %v324 = vshrl.u32 %v323, 7
          %v325 = vadd.s32 %v324, 8
          %v326 = vstv %s313
          %v327 = vadd.s32 %v326, %v324
          %v328 = vadd.s32 %v326, %v325
          %v329 = vlaneseq
          %v330 = vand.u32 %v329, 127
          %v331 = vstv %s314
          %v332 = vadd.s32 %v331, %v330
          %vm333 = vcmp.eq.s32.totalorder %v327, %v332
          %vm334 = vcmp.eq.s32.totalorder %v328, %v332
          %v335 = vld [vmem:[#allocation2] sm:$0xff]
          %v336 = vld [vmem:[#allocation2 + $0x8] sm:$0xff]
          %v337 = vsel %vm333, -1e+30, %v335
          %v338 = vsel %vm334, -1e+30, %v336
          %339 = vst.msk [vmem:[#allocation2] sm:$0xff] %vm217, %v337
          %340 = vst.msk [vmem:[#allocation2 + $0x8] sm:$0xff] %vm217, %v338
        $region44: #{tpu_custom_call.1} parent=27 // pred_fallthru
          _
        %v341 = vld [vmem:[#allocation2] sm:$0xff]
        %v342 = vld [vmem:[#allocation2 + $0x8] sm:$0xff]
        %v343 = vld [vmem:[#allocation3] sm:$0xff]
        %v344 = vld [vmem:[#allocation3 + $0x8] sm:$0xff]
        %v345 = vmax.f32 %v343, %v341
        %v346 = vmax.f32 %v344, %v342
        %v347 = vsub.f32 %v341, %v345
        %v348 = vsub.f32 %v342, %v346
        %v349 = vmul.f32 %v347, 1.442695
        %v350 = vpow.pop %v349
        %v351 = vmul.f32 %v348, 1.442695
        %v352 = vpow.pop %v351
        %v353 = vsub.f32 %v343, %v345
        %v354 = vsub.f32 %v344, %v346
        %v355 = vmul.f32 %v353, 1.442695
        %v356 = vpow.pop %v355
        %v357 = vmul.f32 %v354, 1.442695
        %v358 = vpow.pop %v357
        %v359 = vld [vmem:[#allocation4] sm:$0xff]
        %v360 = vld [vmem:[#allocation4 + $0x8] sm:$0xff]
        %v361 = vmul.f32 %v356, %v359
        %v362 = vmul.f32 %v358, %v360
        %v363 = vadd.f32 %v361, %v350
        %v364 = vadd.f32 %v362, %v352
        %365 = vst.msk [vmem:[#allocation4] sm:$0xff] %vm217, %v363
        %366 = vst.msk [vmem:[#allocation4 + $0x8] sm:$0xff] %vm217, %v364
        %367 = vst.msk [vmem:[#allocation3] sm:$0xff] %vm217, %v345
        %368 = vst.msk [vmem:[#allocation3 + $0x8] sm:$0xff] %vm217, %v346
        // Predicated region
        $region45: #{tpu_custom_call.1} parent=27 // pred_check
          %p369 = pneg %p202
        $region46: #{tpu_custom_call.1} parent=27 // pred_check_branch
          %371 = sbr.rel (%p369) target = $region48
        $region47: #{tpu_custom_call.1} parent=27 // pred_region
          %v372 = vld [vmem:[#allocation3] sm:$0xff]
          %v373 = vld [vmem:[#allocation3 + $0x8] sm:$0xff]
          %v374 = vsel %vm217, %v372, -inf
          %375 = vmax.xlane.f32.xlu0 %v374
          %v376 = vpop.xlane.xlu0 %375
          %v377 = vsel %vm217, %v373, -inf
          %378 = vmax.xlane.f32.xlu0 %v377
          %v379 = vpop.xlane.xlu0 %378
          %v380 = vld [vmem:[#allocation4] sm:$0xff]
          %v381 = vld [vmem:[#allocation4 + $0x8] sm:$0xff]
          %v382 = vsub.f32 %v372, %v376
          %v383 = vsub.f32 %v373, %v379
          %v384 = vmul.f32 %v382, 1.442695
          %v385 = vpow.pop %v384
          %v386 = vmul.f32 %v383, 1.442695
          %v387 = vpow.pop %v386
          %v388 = vmul.f32 %v380, %v385
          %v389 = vmul.f32 %v381, %v387
          %v390 = vsel %vm217, %v388, 0.0
          %391 = vadd.xlane.f32.xlu0 %v390
          %v392 = vpop.xlane.xlu0 %391
          %v393 = vsel %vm217, %v389, 0.0
          %394 = vadd.xlane.f32.xlu0 %v393
          %v395 = vpop.xlane.xlu0 %394
          %v396 = vlog2.pop %v392
          %v397 = vmul.f32 %v396, 0.6931472
          %v398 = vlog2.pop %v395
          %v399 = vmul.f32 %v398, 0.6931472
          %v400 = vadd.f32 %v376, %v397
          %v401 = vadd.f32 %v379, %v399
          %vm402 = vcmask 7168
          %403 = vst.msk [vmem:[%s200] sm:$0xff] %vm402, %v400
          %404 = vst.msk [vmem:[%s200 + $0x8] sm:$0xff] %vm402, %v401
        $region48: #{tpu_custom_call.1} parent=27 // pred_fallthru
          _
        %s405 = smul.u32 2, %s21
        %p406 = scmp.lt.s32.totalorder %s405, 3
        %s407 = scalar_select %p406, %s405, 3
        %s408 = smul.addr %s407, 8
        %s409 = scalar_lea.vmem %s2, %s408
        // Predicated region
        $region49: #{tpu_custom_call.1} parent=27 // pred_check
          %p410 = pneg %p99
        $region50: #{tpu_custom_call.1} parent=27 // pred_check_branch
          %412 = sbr.rel (%p410) target = $region52
        $region51: #{tpu_custom_call.1} parent=27 // pred_region
          %s413 = smul.u32 2, %s21
        $region52: #{tpu_custom_call.1} parent=27 // pred_fallthru
          _
      $region28: #{tpu_custom_call.1} parent=5 // pred_fallthru
        _
      %p414 = scmp.le.s32.totalorder 2, %s12
      // Predicated region
      $region53: #{tpu_custom_call.1} parent=5 // pred_check
        %p415 = pneg %p414
      $region54: #{tpu_custom_call.1} parent=5 // pred_check_branch
        %417 = sbr.rel (%p415) target = $region56
      $region55: #{tpu_custom_call.1} parent=5 // pred_region
        %s418 = ssub.s32 %s12, 2
        // Predicated region
        $region57: #{tpu_custom_call.1} parent=55 // pred_check
          %p419 = pneg %p105
        $region58: #{tpu_custom_call.1} parent=55 // pred_check_branch
          %421 = sbr.rel (%p419) target = $region60
        $region59: #{tpu_custom_call.1} parent=55 // pred_region
          %s422 = smul.u32 2, %s23
          %p423 = scmp.lt.s32.totalorder %s422, 3
          %s424 = scalar_select %p423, %s422, 3
          %s425 = smul.addr %s424, 8
          %s426 = scalar_lea.vmem %s2, %s425
        $region60: #{tpu_custom_call.1} parent=55 // pred_fallthru
          _
      $region56: #{tpu_custom_call.1} parent=5 // pred_fallthru
        _
    $region6: #{tpu_custom_call.1} parent=1 // loop_footer
      %s16 = sadd.s32 1, %s12
    $region7: #{tpu_custom_call.1} parent=1 // loop_footer_branch
      %11 = sbr.rel target = $region3
    $region8: #{tpu_custom_call.1} parent=1 // loop_exit
      _
    %427 = vsyncpa [#allocation6], 1
    %s428 = scalar_lea.sflag [#allocation6], 1
    %429 = vsyncpa %s428, 1
    %430 = vsyncpa [#allocation8], 1

</llo_original>
